<compile_context>
chip_gen: v7x
topology: tpu7x:2x2x1
jax: 0.10.0
libtpu: 0.0.40
codegen_flags: <defaults>
</compile_context>

<pallas_src>
import functools

import jax
import jax.numpy as jnp
from jax.experimental import pallas as pl
from jax.experimental.pallas import tpu as pltpu

ALPHA = 0.5
GAMMA = 2.0
IGNORE_INDEX = -100


def _focal_loss_kernel(logits_ref, target_ref, out_ref, sum_ref, cnt_ref,
                       *, alpha, gamma, ignore_index):
    i = pl.program_id(0)

    @pl.when(i == 0)
    def _init():
        sum_ref[...] = jnp.zeros_like(sum_ref)
        cnt_ref[...] = jnp.zeros_like(cnt_ref)

    x = logits_ref[...].astype(jnp.float32)          # (TILE_N, C), f32 math
    t = target_ref[...]                              # (TILE_N, 1) int32
    n, c = x.shape

    # Row-wise stable log-softmax value at the target class only.
    m = jnp.max(x, axis=1, keepdims=True)            # (TILE_N, 1)
    shifted = x - m
    denom = jnp.sum(jnp.exp(shifted), axis=1, keepdims=True)   # (TILE_N, 1)

    classes = jax.lax.broadcasted_iota(jnp.int32, (n, c), 1)
    onehot = (classes == t).astype(jnp.float32)      # (TILE_N, C); no match for ignore rows
    gathered = jnp.sum(shifted * onehot, axis=1, keepdims=True)  # (x - m)[i, t[i]]

    logpt = gathered - jnp.log(denom)                # (TILE_N, 1)
    pt = jnp.exp(logpt)                              # per-row EUP exp, cheap

    u = 1.0 - pt
    if gamma == 2.0:
        modulator = u * u                            # exact, no log(0) hazard
    elif float(gamma) == int(gamma) and gamma >= 0:
        modulator = u ** int(gamma)                  # integer pow -> multiplies
    else:
        modulator = u ** gamma
    focal = -modulator * logpt                       # (TILE_N, 1)

    valid = (t != ignore_index).astype(jnp.float32)  # (TILE_N, 1)
    weights = jnp.where(t > 0, 1.0 - alpha, alpha).astype(jnp.float32)

    tile_sum = jnp.sum(focal * weights * valid)
    tile_cnt = jnp.sum(valid)

    sum_ref[...] += tile_sum.reshape(1, 1)
    cnt_ref[...] += tile_cnt.reshape(1, 1)

    @pl.when(i == pl.num_programs(0) - 1)
    def _finalize():
        # reduction='mean' with float alpha -> torch.mean over masked rows.
        # If every row is ignored this is 0/0 = NaN, matching torch.mean of an
        # empty selection.
        out_ref[...] = sum_ref[...] / cnt_ref[...]


def focal_loss(logits, target, *, alpha=ALPHA, gamma=GAMMA,
               ignore_index=IGNORE_INDEX, tile_n=256):
    """logits: [N, C] float (f32 or bf16), target: [N] int -> scalar float32."""
    n, c = logits.shape
    target_2d = target.astype(jnp.int32).reshape(n, 1)

    # Sublane-aligned row tile; don't over-tile tiny batches.
    tile_n = int(min(tile_n, 8 * pl.cdiv(n, 8)))
    tile_n = max(8, (tile_n // 8) * 8)
    n_pad = int(tile_n * pl.cdiv(n, tile_n))
    if n_pad != n:
        pad = n_pad - n
        logits = jnp.pad(logits, ((0, pad), (0, 0)))
        target_2d = jnp.pad(target_2d, ((0, pad), (0, 0)),
                            constant_values=ignore_index)  # pad rows masked out

    kernel = functools.partial(
        _focal_loss_kernel, alpha=float(alpha), gamma=float(gamma),
        ignore_index=int(ignore_index))

    out = pl.pallas_call(
        kernel,
        out_shape=jax.ShapeDtypeStruct((1, 1), jnp.float32),
        grid_spec=pltpu.PrefetchScalarGridSpec(
            num_scalar_prefetch=0,
            grid=(n_pad // tile_n,),
            in_specs=[
                pl.BlockSpec((tile_n, c), lambda i: (i, 0)),   # logits tile
                pl.BlockSpec((tile_n, 1), lambda i: (i, 0)),   # target tile
            ],
            out_specs=pl.BlockSpec((1, 1), lambda i: (0, 0)),  # resident accumulator out
            scratch_shapes=[pltpu.VMEM((1, 1), jnp.float32),   # running sum
                            pltpu.VMEM((1, 1), jnp.float32)],  # running count
        ),
        compiler_params=pltpu.CompilerParams(
            dimension_semantics=("arbitrary",),      # reduction-carrying axis
            vmem_limit_bytes=32 * 1024 * 1024,       # safe on v5e/v6e/v7x
        ),
        # NOTE: no wrapper-side upcast — bf16 logits stay bf16 over HBM;
        # the kernel casts to f32 internally (v5e has no bf16 VPU/EUP anyway).
    )(logits, target_2d)
    return out[0, 0]


def _focal_loss_ref(logits, target, *, alpha=ALPHA, gamma=GAMMA,
                    ignore_index=IGNORE_INDEX):
    # Pure-JAX reference mirroring the PyTorch forward (softmax path, float alpha).
    logits = logits.astype(jnp.float32)
    mask = target != ignore_index
    logp_all = jax.nn.log_softmax(logits, axis=1)
    p_all = jax.nn.softmax(logits, axis=1)
    idx = jnp.clip(target, 0, logits.shape[1] - 1)
    pt = jnp.take_along_axis(p_all, idx[:, None], axis=1)[:, 0]
    logpt = jnp.take_along_axis(logp_all, idx[:, None], axis=1)[:, 0]
    focal = -1.0 * (1.0 - pt) ** gamma * logpt
    w = jnp.where(target > 0, 1.0 - alpha, alpha)
    tmp = focal * w * mask
    return jnp.sum(tmp) / jnp.sum(mask)


if __name__ == "__main__":
    key = jax.random.PRNGKey(0)

    # Test 1: small batch, single tile, one ignored row.
    N, C = 8, 16
    k1, k2, k3, k4 = jax.random.split(key, 4)
    logits = jax.random.normal(k1, (N, C), dtype=jnp.float32)
    target = jax.random.randint(k2, (N,), 0, C, dtype=jnp.int32)
    target = target.at[3].set(IGNORE_INDEX)
    loss = jax.block_until_ready(focal_loss(logits, target))
    ref = _focal_loss_ref(logits, target)
    assert jnp.allclose(loss, ref, rtol=1e-5, atol=1e-6), (loss, ref)

    # Test 2: ragged batch (padding path) + multi-tile grid accumulation.
    N2, C2 = 20, 32
    logits2 = jax.random.normal(k3, (N2, C2), dtype=jnp.float32)
    target2 = jax.random.randint(k4, (N2,), 0, C2, dtype=jnp.int32)
    target2 = target2.at[7].set(IGNORE_INDEX)
    loss2 = jax.block_until_ready(focal_loss(logits2, target2, tile_n=8))
    ref2 = _focal_loss_ref(logits2, target2)
    assert jnp.allclose(loss2, ref2, rtol=1e-5, atol=1e-6), (loss2, ref2)

    print("KERNEL_OK")
</pallas_src>

<mosaic_0001>
module attributes {stable_mosaic.version = 11 : i64} {
  func.func @_focal_loss_kernel(%arg0: i32, %arg1: memref<8x16xf32, #tpu.memory_space<vmem>>, %arg2: memref<8x1xi32, #tpu.memory_space<vmem>>, %arg3: memref<1x1xf32, #tpu.memory_space<vmem>>, %arg4: memref<1x1xf32, #tpu.memory_space<vmem>>, %arg5: memref<1x1xf32, #tpu.memory_space<vmem>>) attributes {dimension_semantics = [#tpu.dimension_semantics<arbitrary>], iteration_bounds = array<i64: 1>, scalar_prefetch = 0 : i64, scratch_operands = 2 : i64, tpu.core_type = #tpu.core_type<tc>, window_params = [{transform_indices = @transform_0, window_bounds = array<i64: 8, 16>}, {transform_indices = @transform_1, window_bounds = array<i64: 8, 1>}, {pipeline_mode = #tpu.pipeline_mode<synchronous>, transform_indices = @transform_2, window_bounds = array<i64: 1, 1>}]} {
    %c0_i32 = arith.constant 0 : i32
    %0 = arith.cmpi eq, %arg0, %c0_i32 : i32
    %1 = arith.extui %0 : i1 to i32
    %c0_i32_0 = arith.constant 0 : i32
    %2 = arith.cmpi ne, %1, %c0_i32_0 : i32
    scf.if %2 {
      %cst_23 = arith.constant 0.000000e+00 : f32
      %59 = vector.broadcast %cst_23 : f32 to vector<1x1xf32>
      %c0_24 = arith.constant 0 : index
      %c0_25 = arith.constant 0 : index
      %60 = vector.load %arg4[%c0_24, %c0_25] : memref<1x1xf32, #tpu.memory_space<vmem>>, vector<1x1xf32>
      tpu.vector_store %arg4[%c0_24, %c0_25], %59 {strides = array<i32>} : memref<1x1xf32, #tpu.memory_space<vmem>>, vector<1x1xf32>,
      %cst_26 = arith.constant 0.000000e+00 : f32
      %61 = vector.broadcast %cst_26 : f32 to vector<1x1xf32>
      %c0_27 = arith.constant 0 : index
      %c0_28 = arith.constant 0 : index
      %62 = vector.load %arg5[%c0_27, %c0_28] : memref<1x1xf32, #tpu.memory_space<vmem>>, vector<1x1xf32>
      tpu.vector_store %arg5[%c0_27, %c0_28], %61 {strides = array<i32>} : memref<1x1xf32, #tpu.memory_space<vmem>>, vector<1x1xf32>,
    } else {
    }
    %c0 = arith.constant 0 : index
    %c0_1 = arith.constant 0 : index
    %3 = vector.load %arg1[%c0, %c0_1] : memref<8x16xf32, #tpu.memory_space<vmem>>, vector<8x16xf32>
    %c0_2 = arith.constant 0 : index
    %c0_3 = arith.constant 0 : index
    %4 = vector.load %arg2[%c0_2, %c0_3] : memref<8x1xi32, #tpu.memory_space<vmem>>, vector<8x1xi32>
    %cst = arith.constant dense<0xFF800000> : vector<8xf32>
    %5 = vector.multi_reduction <maximumf>, %3, %cst [1] : vector<8x16xf32> to vector<8xf32>
    %6 = vector.shape_cast %5 : vector<8xf32> to vector<8x1xf32>
    %7 = vector.broadcast %6 : vector<8x1xf32> to vector<8x16xf32>
    %8 = arith.subf %3, %7 : vector<8x16xf32>
    %9 = math.exp %8 : vector<8x16xf32>
    %cst_4 = arith.constant dense<0.000000e+00> : vector<8xf32>
    %10 = vector.multi_reduction <add>, %9, %cst_4 [1] : vector<8x16xf32> to vector<8xf32>
    %11 = vector.shape_cast %10 : vector<8xf32> to vector<8x1xf32>
    %12 = tpu.iota {dimensions = array<i32: 1>} : vector<8x16xi32>
    %13 = vector.broadcast %4 : vector<8x1xi32> to vector<8x16xi32>
    %14 = arith.cmpi eq, %12, %13 : vector<8x16xi32>
    %15 = arith.extui %14 : vector<8x16xi1> to vector<8x16xi32>
    %16 = arith.sitofp %15 : vector<8x16xi32> to vector<8x16xf32>
    %17 = arith.mulf %8, %16 : vector<8x16xf32>
    %cst_5 = arith.constant dense<0.000000e+00> : vector<8xf32>
    %18 = vector.multi_reduction <add>, %17, %cst_5 [1] : vector<8x16xf32> to vector<8xf32>
    %19 = vector.shape_cast %18 : vector<8xf32> to vector<8x1xf32>
    %20 = math.log %11 : vector<8x1xf32>
    %21 = arith.subf %19, %20 : vector<8x1xf32>
    %22 = math.exp %21 : vector<8x1xf32>
    %cst_6 = arith.constant 1.000000e+00 : f32
    %23 = vector.broadcast %cst_6 : f32 to vector<8x1xf32>
    %24 = arith.subf %23, %22 : vector<8x1xf32>
    %25 = arith.mulf %24, %24 : vector<8x1xf32>
    %cst_7 = arith.constant 0.000000e+00 : f32
    %26 = vector.broadcast %cst_7 : f32 to vector<8x1xf32>
    %27 = arith.subf %26, %25 : vector<8x1xf32>
    %28 = arith.mulf %27, %21 : vector<8x1xf32>
    %c-100_i32 = arith.constant -100 : i32
    %29 = vector.broadcast %c-100_i32 : i32 to vector<8x1xi32>
    %30 = arith.cmpi ne, %4, %29 : vector<8x1xi32>
    %31 = arith.extui %30 : vector<8x1xi1> to vector<8x1xi32>
    %32 = arith.sitofp %31 : vector<8x1xi32> to vector<8x1xf32>
    %c0_i32_8 = arith.constant 0 : i32
    %33 = vector.broadcast %c0_i32_8 : i32 to vector<8x1xi32>
    %34 = arith.cmpi sgt, %4, %33 : vector<8x1xi32>
    %cst_9 = arith.constant 5.000000e-01 : f32
    %cst_10 = arith.constant 5.000000e-01 : f32
    %35 = vector.broadcast %cst_9 : f32 to vector<8x1xf32>
    %36 = vector.broadcast %cst_10 : f32 to vector<8x1xf32>
    %37 = arith.select %34, %35, %36 : vector<8x1xi1>, vector<8x1xf32>
    %38 = arith.mulf %28, %37 : vector<8x1xf32>
    %39 = arith.mulf %38, %32 : vector<8x1xf32>
    %40 = vector.shape_cast %39 : vector<8x1xf32> to vector<1x8x1xf32>
    %cst_11 = arith.constant dense<0.000000e+00> : vector<1xf32>
    %41 = vector.multi_reduction <add>, %40, %cst_11 [1, 2] : vector<1x8x1xf32> to vector<1xf32>
    %42 = vector.shape_cast %41 : vector<1xf32> to vector<1x1x1xf32>
    %43 = vector.extract %42[0, 0, 0] : f32 from vector<1x1x1xf32>
    %44 = vector.shape_cast %32 : vector<8x1xf32> to vector<1x8x1xf32>
    %cst_12 = arith.constant dense<0.000000e+00> : vector<1xf32>
    %45 = vector.multi_reduction <add>, %44, %cst_12 [1, 2] : vector<1x8x1xf32> to vector<1xf32>
    %46 = vector.shape_cast %45 : vector<1xf32> to vector<1x1x1xf32>
    %47 = vector.extract %46[0, 0, 0] : f32 from vector<1x1x1xf32>
    %c0_13 = arith.constant 0 : index
    %c0_14 = arith.constant 0 : index
    %48 = vector.load %arg4[%c0_13, %c0_14] : memref<1x1xf32, #tpu.memory_space<vmem>>, vector<1x1xf32>
    %49 = vector.broadcast %43 : f32 to vector<1x1xf32>
    %50 = arith.addf %48, %49 : vector<1x1xf32>
    %c0_15 = arith.constant 0 : index
    %c0_16 = arith.constant 0 : index
    %51 = vector.load %arg4[%c0_15, %c0_16] : memref<1x1xf32, #tpu.memory_space<vmem>>, vector<1x1xf32>
    tpu.vector_store %arg4[%c0_15, %c0_16], %50 {strides = array<i32>} : memref<1x1xf32, #tpu.memory_space<vmem>>, vector<1x1xf32>,
    %c0_17 = arith.constant 0 : index
    %c0_18 = arith.constant 0 : index
    %52 = vector.load %arg5[%c0_17, %c0_18] : memref<1x1xf32, #tpu.memory_space<vmem>>, vector<1x1xf32>
    %53 = vector.broadcast %47 : f32 to vector<1x1xf32>
    %54 = arith.addf %52, %53 : vector<1x1xf32>
    %c0_19 = arith.constant 0 : index
    %c0_20 = arith.constant 0 : index
    %55 = vector.load %arg5[%c0_19, %c0_20] : memref<1x1xf32, #tpu.memory_space<vmem>>, vector<1x1xf32>
    tpu.vector_store %arg5[%c0_19, %c0_20], %54 {strides = array<i32>} : memref<1x1xf32, #tpu.memory_space<vmem>>, vector<1x1xf32>,
    %c0_i32_21 = arith.constant 0 : i32
    %56 = arith.cmpi eq, %arg0, %c0_i32_21 : i32
    %57 = arith.extui %56 : i1 to i32
    %c0_i32_22 = arith.constant 0 : i32
    %58 = arith.cmpi ne, %57, %c0_i32_22 : i32
    scf.if %58 {
      %c0_23 = arith.constant 0 : index
      %c0_24 = arith.constant 0 : index
      %59 = vector.load %arg4[%c0_23, %c0_24] : memref<1x1xf32, #tpu.memory_space<vmem>>, vector<1x1xf32>
      %c0_25 = arith.constant 0 : index
      %c0_26 = arith.constant 0 : index
      %60 = vector.load %arg5[%c0_25, %c0_26] : memref<1x1xf32, #tpu.memory_space<vmem>>, vector<1x1xf32>
      %61 = arith.divf %59, %60 : vector<1x1xf32>
      %c0_27 = arith.constant 0 : index
      %c0_28 = arith.constant 0 : index
      %62 = vector.load %arg3[%c0_27, %c0_28] : memref<1x1xf32, #tpu.memory_space<vmem>>, vector<1x1xf32>
      tpu.vector_store %arg3[%c0_27, %c0_28], %61 {strides = array<i32>} : memref<1x1xf32, #tpu.memory_space<vmem>>, vector<1x1xf32>,
    } else {
    }
    return
  }
  func.func @transform_0(%arg0: i32) -> (i32, i32) {
    %c0_i32 = arith.constant 0 : i32
    %c0_i32_0 = arith.constant 0 : i32
    return %arg0, %c0_i32 : i32, i32
  }
  func.func @transform_1(%arg0: i32) -> (i32, i32) {
    %c0_i32 = arith.constant 0 : i32
    %c0_i32_0 = arith.constant 0 : i32
    return %arg0, %c0_i32 : i32, i32
  }
  func.func @transform_2(%arg0: i32) -> (i32, i32) {
    %c0_i32 = arith.constant 0 : i32
    %c0_i32_0 = arith.constant 0 : i32
    %c0_i32_1 = arith.constant 0 : i32
    return %c0_i32, %c0_i32_0 : i32, i32
  }
}

</mosaic_0001>

<llo_original>
// kernel: tpu_custom_call.1
$region0: #{tpu_custom_call.1}
  #allocation0 [shape = 'u32[]', space=smem, size = 0x4, offset = 0x4, fixed_abs, tag = 'smem constant byte address 0x4 - core index']
  #allocation1 [shape = 'u32[144,128]{1,0:T(1,128)}', space=vmem, size = 0x12000, scoped, tag = 'internal scratch']
  #allocation2 [shape = 'f32[1,1]{1,0:T(1,128)}', space=vmem, size = 0x200, scoped, tag = 'scratch operand']
  #allocation3 [shape = 'f32[1,1]{1,0:T(1,128)}', space=vmem, size = 0x200, scoped, tag = 'scratch operand']
  %s0 = inlined_call_operand.vmem [shape: f32[8,16], index: 0, kind: input, shape index: {}]
  %s1 = inlined_call_operand.vmem [shape: s32[8,1], index: 1, kind: input, shape index: {}]
  %s2 = inlined_call_operand.hbm [shape: f32[1,1], index: 2, kind: output, shape index: {}]
  %s3 = sld [smem:[#allocation0]]
  $region26: #{tpu_custom_call.1} parent=0
    _
  %s5 = ssub.s32 1, %s3
  %s6 = scalar_select 0, %s5, %s3
  $region1: #{tpu_custom_call.1} parent=0
    #allocation4 [shape = 'u8[512]{0}', space=vmem, size = 0x400, scoped, tag = 'output window, operand 0, single buffered']
    #allocation5 [shape = 's32[1]{0}', space=sflag, size = 0x4, scoped, tag = 'scoped memory for tpu_custom_call.1']
    %7 = vsyncpa [#allocation5], 0
    // Predicated region
    $region2: #{tpu_custom_call.1} parent=1 // pred_check
      _
    $region3: #{tpu_custom_call.1} parent=1 // pred_check_branch
      %9 = sbr.rel (0) target = $region5
    $region4: #{tpu_custom_call.1} parent=1 // pred_region
      _
    $region5: #{tpu_custom_call.1} parent=1 // pred_fallthru
      _
    // Predicated region
    $region6: #{tpu_custom_call.1} parent=1 // pred_check
      _
    $region7: #{tpu_custom_call.1} parent=1 // pred_check_branch
      %11 = sbr.rel (0) target = $region9
    $region8: #{tpu_custom_call.1} parent=1 // pred_region
      _
    $region9: #{tpu_custom_call.1} parent=1 // pred_fallthru
      _
    %p12 = scmp.eq.s32.totalorder 0, 0
    // Predicated region
    $region10: #{tpu_custom_call.1} parent=1 // pred_check
      %p13 = pneg %p12
    $region11: #{tpu_custom_call.1} parent=1 // pred_check_branch
      %15 = sbr.rel (%p13) target = $region13
    $region12: #{tpu_custom_call.1} parent=1 // pred_region
      %vm16 = vcmask 0
      %17 = vst.msk [vmem:[#allocation2] sm:$0x1] %vm16, 0.0
      %18 = vst.msk [vmem:[#allocation3] sm:$0x1] %vm16, 0.0
    $region13: #{tpu_custom_call.1} parent=1 // pred_fallthru
      _
    %v19 = vld [vmem:[%s0] sm:$0xff]
    %v20 = vld [vmem:[%s1] sm:$0xff]
    %vm21 = vcmask 130048
    %v22 = vsel %vm21, %v19, -inf
    %23 = vmax.xlane.f32.xlu0 %v22
    %v24 = vpop.xlane.xlu0 %23
    %v25 = vsub.f32 %v19, %v24
    %v26 = vmul.f32 %v25, 1.442695
    %v27 = vpow.pop %v26
    %v28 = vsel %vm21, %v27, 0.0
    %29 = vadd.xlane.f32.xlu0 %v28
    %v30 = vpop.xlane.xlu0 %29
    %v31 = vlaneseq
    %v32 = vand.u32 %v31, 127
    %33 = vset.pattern.permute.xlu0 0
    %34 = vperm.xlu0 %33, %v20
    %v35 = vpop.permute.xlu0 %34
    %vm36 = vcmp.eq.s32.totalorder %v32, %v35
    %v37 = vsel %vm36, 1, 0
    %v38 = vcvt.s32.f32 %v37
    %v39 = vmul.f32 %v25, %v38
    %v40 = vsel %vm21, %v39, 0.0
    %41 = vadd.xlane.f32.xlu0 %v40
    %v42 = vpop.xlane.xlu0 %41
    %v43 = vlog2.pop %v30
    %v44 = vmul.f32 %v43, 0.6931472
    %v45 = vsub.f32 %v42, %v44
    %v46 = vmul.f32 %v45, 1.442695
    %v47 = vpow.pop %v46
    %v48 = vsub.f32 1.0, %v47
    %v49 = vmul.f32 %v48, %v48
    %v50 = vsub.f32 0.0, %v49
    %v51 = vmul.f32 %v50, %v45
    %vm52 = vcmp.ne.s32.totalorder %v20, 4294967196
    %v53 = vsel %vm52, 1, 0
    %v54 = vcvt.s32.f32 %v53
    %v55 = vmul.f32 %v51, 0.5
    %v56 = vmul.f32 %v55, %v54
    %vm57 = vcmask 7168
    %v58 = vsel %vm57, %v56, 0.0
    %59 = vadd.xlane.f32.xlu0 %v58
    %v60 = vpop.xlane.xlu0 %59
    %v61 = vrot.slane %v60, 4
    %v62 = vadd.f32 %v60, %v61
    %v63 = vrot.slane %v62, 2
    %v64 = vadd.f32 %v62, %v63
    %v65 = vrot.slane %v64, 1
    %v66 = vadd.f32 %v64, %v65
    %s67 = vtos %v66
    %v68 = vsel %vm57, %v54, 0.0
    %69 = vadd.xlane.f32.xlu0 %v68
    %v70 = vpop.xlane.xlu0 %69
    %v71 = vrot.slane %v70, 4
    %v72 = vadd.f32 %v70, %v71
    %v73 = vrot.slane %v72, 2
    %v74 = vadd.f32 %v72, %v73
    %v75 = vrot.slane %v74, 1
    %v76 = vadd.f32 %v74, %v75
    %s77 = vtos %v76
    %v78 = vld [vmem:[#allocation2] sm:$0x1]
    %v79 = vstv %s67
    %v80 = vadd.f32 %v78, %v79
    %vm81 = vcmask 0
    %82 = vst.msk [vmem:[#allocation2] sm:$0x1] %vm81, %v80
    %v83 = vld [vmem:[#allocation3] sm:$0x1]
    %v84 = vstv %s77
    %v85 = vadd.f32 %v83, %v84
    %86 = vst.msk [vmem:[#allocation3] sm:$0x1] %vm81, %v85
    // Predicated region
    $region14: #{tpu_custom_call.1} parent=1 // pred_check
      %p87 = pneg %p12
    $region15: #{tpu_custom_call.1} parent=1 // pred_check_branch
      %89 = sbr.rel (%p87) target = $region17
    $region16: #{tpu_custom_call.1} parent=1 // pred_region
      %v90 = vld [vmem:[#allocation2] sm:$0x1]
      %v91 = vld [vmem:[#allocation3] sm:$0x1]
      %v92 = vrcp.pop %v91
      %v93 = vmul.f32 %v90, %v92
      %94 = vst.msk [vmem:[#allocation4] sm:$0x1] %vm81, %v93
    $region17: #{tpu_custom_call.1} parent=1 // pred_fallthru
      _
    // Predicated region
    $region18: #{tpu_custom_call.1} parent=1 // pred_check
      _
    $region19: #{tpu_custom_call.1} parent=1 // pred_check_branch
      %96 = sbr.rel (0) target = $region21
    $region20: #{tpu_custom_call.1} parent=1 // pred_region
      %s98 = ssub.s32 16, 16
      %99 = vsyncadd [#allocation5], %s98
      %s101 = sshll.u32 [#allocation4], 4
      %s102 = int_to_ptr.vmem [resolvable:$true] %s101
      %104 = dma.vmem_to_hbm [thread:$0]  %s102, 16, %s2, [#allocation5]
    $region21: #{tpu_custom_call.1} parent=1 // pred_fallthru
      _
    // Predicated region
    $region22: #{tpu_custom_call.1} parent=1 // pred_check
      _
    $region23: #{tpu_custom_call.1} parent=1 // pred_check_branch
      %106 = sbr.rel (0) target = $region25
    $region24: #{tpu_custom_call.1} parent=1 // pred_region
      %107 = dma.done [#allocation5], 16
    $region25: #{tpu_custom_call.1} parent=1 // pred_fallthru
      _
    %108 = vsyncpa [#allocation5], 1

</llo_original>
